<compile_context>
chip_gen: v7x
topology: tpu7x:2x2x1
jax: 0.10.0
libtpu: 0.0.40
codegen_flags: <defaults>
</compile_context>

<pallas_src>
import functools

import jax
import jax.numpy as jnp
from jax.experimental import pallas as pl
from jax.experimental.pallas import tpu as pltpu

ALPHA = 0.8
GAMMA = 2.0

_LANES = 128
_MAX_BLOCK_ROWS = 8192        # 8192 * 128 * 4B = 4 MiB per f32 input block


def _sublane_rows(dtype):
    """Minimum sublane multiple for a dtype ((8,128) f32, (16,128) bf16, (32,128) i8)."""
    bits = jnp.dtype(dtype).itemsize * 8
    return max(8, 256 // bits)


def _tpu_topology():
    """Best-effort (num_tensorcores, physical_vmem_bytes); conservative fallback."""
    cores, vmem = 2, 64 << 20   # v7x-conservative defaults (keeps old behavior)
    try:
        info = pltpu.get_tpu_info()
        for name in ("num_cores", "core_count", "num_tensorcores", "tensor_core_count"):
            val = getattr(info, name, None)
            if isinstance(val, int) and val > 0:
                cores = val
                break
        val = getattr(info, "vmem_capacity_bytes", None)
        if isinstance(val, int) and val > 0:
            vmem = val
    except Exception:
        pass
    return cores, vmem


def _bce_terms(x, t):
    """-(t*log(sigmoid(x)) + (1-t)*log(1-sigmoid(x))) with torch's -100 log clamp,
    via a numerically stable softplus: only 2 transcendentals (exp + log)."""
    sp = jnp.log(1.0 + jnp.exp(-jnp.abs(x))) + jnp.maximum(x, 0.0)   # softplus(x)
    log_p = jnp.maximum(x - sp, -100.0)
    log_1mp = jnp.maximum(-sp, -100.0)
    return -(t * log_p + (1.0 - t) * log_1mp)


def _focal_bce_kernel(x_ref, t_ref, o_ref, *, block_r, tiles_per_split,
                      rows_total, ilp, block_mask):
    i = pl.program_id(1)

    @pl.when(i == 0)
    def _():
        o_ref[...] = jnp.zeros_like(o_ref)

    x = x_ref[...].astype(jnp.float32)
    t = t_ref[...].astype(jnp.float32)
    bce = _bce_terms(x, t)

    # Collapse the block to an (ilp*8, 128) tile with pure VPU adds; `ilp`
    # independent accumulation chains, no cross-lane reduce in the hot loop.
    # TODO(synk): verify via pl.lower_as_mlir that this row-regrouping reshape
    # stays a free sublane regroup (it preserves the minor (8,128) tiling).
    slabs = block_r // (8 * ilp)
    bce3 = bce.reshape(slabs, 8 * ilp, _LANES)

    if not block_mask:
        o_ref[...] += bce3.sum(axis=0)
    else:
        s = pl.program_id(0)
        blk = s * tiles_per_split + i            # logical (unclamped) block id
        start = blk * block_r

        @pl.when(start + block_r <= rows_total)  # full, fully in-bounds block
        def _():
            o_ref[...] += bce3.sum(axis=0)

        @pl.when(start + block_r > rows_total)   # partial tail or duplicated block
        def _():
            row = jax.lax.broadcasted_iota(jnp.int32, (block_r, _LANES), 0)
            keep = (start + row) < rows_total    # all-False for duplicated blocks
            o_ref[...] += jnp.where(keep, bce, 0.0).reshape(
                slabs, 8 * ilp, _LANES).sum(axis=0)


def focal_loss(inputs, targets, alpha=ALPHA, gamma=GAMMA, smooth=1,
               max_block_rows=_MAX_BLOCK_ROWS):
    """Pallas TPU implementation of FocalLoss.forward. Returns a scalar f32."""
    del smooth  # unused by the reference forward (kept for signature parity)
    x = inputs.reshape(-1)
    t = targets.reshape(-1)
    n = x.shape[0]

    # Native dtypes, no pads: the kernel consumes whole (row_align*128)-element
    # tiles; the < 1-tile remainder is handled by a tiny JAX epilogue below.
    row_align = max(_sublane_rows(x.dtype), _sublane_rows(t.dtype))
    chunk = row_align * _LANES
    n_main = (n // chunk) * chunk
    rows = n_main // _LANES

    num_cores, vmem_phys = _tpu_topology()

    if rows > 0:
        if rows <= max_block_rows:
            block_r = rows                                        # single full block
        else:
            block_r = max((max_block_rows // row_align) * row_align, row_align)
        num_blocks = pl.cdiv(rows, block_r)
        num_splits = 2 if (num_blocks >= 2 and num_cores >= 2) else 1
        tiles_per_split = pl.cdiv(num_blocks, num_splits)
        clamp_blocks = num_splits * tiles_per_split != num_blocks
        block_mask = clamp_blocks or (rows % block_r != 0)

        groups = block_r // 8
        ilp = next(c for c in (8, 4, 2, 1) if groups % c == 0)
        acc_rows = 8 * ilp

        x2 = (x if n_main == n else x[:n_main]).reshape(rows, _LANES)
        t2 = (t if n_main == n else t[:n_main]).reshape(rows, _LANES)

        def in_map(s, i):
            blk = s * tiles_per_split + i
            if clamp_blocks:
                blk = jnp.minimum(blk, num_blocks - 1)   # duplicated blocks masked to 0
            return (blk, 0)

        kernel = functools.partial(
            _focal_bce_kernel, block_r=block_r, tiles_per_split=tiles_per_split,
            rows_total=rows, ilp=ilp, block_mask=block_mask)

        in_bytes = block_r * _LANES * (jnp.dtype(x2.dtype).itemsize
                                       + jnp.dtype(t2.dtype).itemsize)
        out_bytes = num_splits * acc_rows * _LANES * 4
        needed = 2 * in_bytes + out_bytes + (2 << 20)     # double-buffered inputs
        vmem_limit = max(min(max(2 * needed, 32 << 20), (3 * vmem_phys) // 4), needed)

        partials = pl.pallas_call(
            kernel,
            out_shape=jax.ShapeDtypeStruct((num_splits * acc_rows, _LANES),
                                           jnp.float32),
            grid_spec=pltpu.PrefetchScalarGridSpec(
                num_scalar_prefetch=0,
                grid=(num_splits, tiles_per_split),
                in_specs=[
                    pl.BlockSpec((block_r, _LANES), in_map),
                    pl.BlockSpec((block_r, _LANES), in_map),
                ],
                out_specs=pl.BlockSpec((acc_rows, _LANES), lambda s, i: (s, 0)),
            ),
            compiler_params=pltpu.CompilerParams(
                dimension_semantics=("parallel", "arbitrary"),
                vmem_limit_bytes=int(vmem_limit),
            ),
        )(x2, t2)
        main_sum = partials.sum()
    else:
        main_sum = jnp.float32(0.0)

    # Tiny epilogue: sub-tile remainder + final reduce + focal transform.
    if n_main != n:
        xt = x[n_main:].astype(jnp.float32)
        tt = t[n_main:].astype(jnp.float32)
        main_sum = main_sum + _bce_terms(xt, tt).sum()

    bce = main_sum / jnp.float32(n)
    z = 1.0 - jnp.exp(-bce)
    zg = z * z if gamma == 2 else z ** gamma
    return (alpha * zg * bce).astype(jnp.float32)


def _reference_focal_loss(inputs, targets, alpha=ALPHA, gamma=GAMMA):
    """Pure-JAX reference mirroring the PyTorch module (sigmoid + clamped logs)."""
    p = jnp.clip(jax.nn.sigmoid(inputs.reshape(-1).astype(jnp.float32)), 0.0, 1.0)
    t = targets.reshape(-1).astype(jnp.float32)
    log_p = jnp.maximum(jnp.log(p), -100.0)
    log_1mp = jnp.maximum(jnp.log(1.0 - p), -100.0)
    bce = jnp.mean(-(t * log_p + (1.0 - t) * log_1mp))
    return alpha * (1.0 - jnp.exp(-bce)) ** gamma * bce


if __name__ == "__main__":
    key = jax.random.PRNGKey(0)
    k_x, k_t = jax.random.split(key)

    def check(shape, t_dtype=jnp.float32, **kw):
        x = jax.random.normal(k_x, shape, dtype=jnp.float32) * 2.5
        t = (jax.random.uniform(k_t, shape) > 0.5).astype(t_dtype)
        out = jax.block_until_ready(focal_loss(x, t, **kw))
        ref = _reference_focal_loss(x, t)
        # Softplus formulation differs from torch only at |x| >~ 16.6; at these
        # magnitudes agreement is well inside this tolerance.
        assert jnp.allclose(out, ref, rtol=1e-4, atol=1e-6), (shape, out, ref)

    # 1) Typical NCHW logits + f32 binary mask: single-block fast path.
    check((2, 4, 16, 16))
    # 2) Ragged numel smaller than one tile: pure JAX tail path.
    check((1, 3, 17, 19))
    # 3) Multi-block grid + 2-way split + partial/duplicated-block masking +
    #    narrow (bf16) target dtype + sub-tile tail epilogue.
    check((2, 2, 52, 52), t_dtype=jnp.bfloat16, max_block_rows=32)

    print("KERNEL_OK")
</pallas_src>

<mosaic_0001>
module attributes {stable_mosaic.version = 11 : i64} {
  func.func @_focal_bce_kernel(%arg0: i32, %arg1: i32, %arg2: memref<16x128xf32, #tpu.memory_space<vmem>>, %arg3: memref<16x128xf32, #tpu.memory_space<vmem>>, %arg4: memref<16x128xf32, #tpu.memory_space<vmem>>) attributes {dimension_semantics = [#tpu.dimension_semantics<parallel>, #tpu.dimension_semantics<arbitrary>], iteration_bounds = array<i64: 1, 1>, scalar_prefetch = 0 : i64, scratch_operands = 0 : i64, tpu.core_type = #tpu.core_type<tc>, window_params = [{transform_indices = @transform_0, window_bounds = array<i64: 16, 128>}, {transform_indices = @transform_1, window_bounds = array<i64: 16, 128>}, {transform_indices = @transform_2, window_bounds = array<i64: 16, 128>}]} {
    %c0_i32 = arith.constant 0 : i32
    %0 = arith.cmpi eq, %arg1, %c0_i32 : i32
    %1 = arith.extui %0 : i1 to i32
    %c0_i32_0 = arith.constant 0 : i32
    %2 = arith.cmpi ne, %1, %c0_i32_0 : i32
    scf.if %2 {
      %cst_16 = arith.constant 0.000000e+00 : f32
      %34 = vector.broadcast %cst_16 : f32 to vector<16x128xf32>
      %c0_17 = arith.constant 0 : index
      %c0_18 = arith.constant 0 : index
      %35 = vector.load %arg4[%c0_17, %c0_18] : memref<16x128xf32, #tpu.memory_space<vmem>>, vector<16x128xf32>
      tpu.vector_store %arg4[%c0_17, %c0_18], %34 {strides = array<i32>} : memref<16x128xf32, #tpu.memory_space<vmem>>, vector<16x128xf32>,
    } else {
    }
    %c0 = arith.constant 0 : index
    %c0_1 = arith.constant 0 : index
    %3 = vector.load %arg2[%c0, %c0_1] : memref<16x128xf32, #tpu.memory_space<vmem>>, vector<16x128xf32>
    %c0_2 = arith.constant 0 : index
    %c0_3 = arith.constant 0 : index
    %4 = vector.load %arg3[%c0_2, %c0_3] : memref<16x128xf32, #tpu.memory_space<vmem>>, vector<16x128xf32>
    %5 = math.absf %3 : vector<16x128xf32>
    %cst = arith.constant 0.000000e+00 : f32
    %6 = vector.broadcast %cst : f32 to vector<16x128xf32>
    %7 = arith.subf %6, %5 : vector<16x128xf32>
    %8 = math.exp %7 : vector<16x128xf32>
    %cst_4 = arith.constant 1.000000e+00 : f32
    %9 = vector.broadcast %cst_4 : f32 to vector<16x128xf32>
    %10 = arith.addf %9, %8 : vector<16x128xf32>
    %11 = math.log %10 : vector<16x128xf32>
    %cst_5 = arith.constant 0.000000e+00 : f32
    %12 = vector.broadcast %cst_5 : f32 to vector<16x128xf32>
    %13 = arith.maximumf %3, %12 : vector<16x128xf32>
    %14 = arith.addf %11, %13 : vector<16x128xf32>
    %15 = arith.subf %3, %14 : vector<16x128xf32>
    %cst_6 = arith.constant -1.000000e+02 : f32
    %16 = vector.broadcast %cst_6 : f32 to vector<16x128xf32>
    %17 = arith.maximumf %15, %16 : vector<16x128xf32>
    %cst_7 = arith.constant 0.000000e+00 : f32
    %18 = vector.broadcast %cst_7 : f32 to vector<16x128xf32>
    %19 = arith.subf %18, %14 : vector<16x128xf32>
    %cst_8 = arith.constant -1.000000e+02 : f32
    %20 = vector.broadcast %cst_8 : f32 to vector<16x128xf32>
    %21 = arith.maximumf %19, %20 : vector<16x128xf32>
    %22 = arith.mulf %4, %17 : vector<16x128xf32>
    %cst_9 = arith.constant 1.000000e+00 : f32
    %23 = vector.broadcast %cst_9 : f32 to vector<16x128xf32>
    %24 = arith.subf %23, %4 : vector<16x128xf32>
    %25 = arith.mulf %24, %21 : vector<16x128xf32>
    %26 = arith.addf %22, %25 : vector<16x128xf32>
    %cst_10 = arith.constant 0.000000e+00 : f32
    %27 = vector.broadcast %cst_10 : f32 to vector<16x128xf32>
    %28 = arith.subf %27, %26 : vector<16x128xf32>
    %29 = vector.shape_cast %28 : vector<16x128xf32> to vector<1x16x128xf32>
    %c0_11 = arith.constant 0 : index
    %c0_12 = arith.constant 0 : index
    %30 = vector.load %arg4[%c0_11, %c0_12] : memref<16x128xf32, #tpu.memory_space<vmem>>, vector<16x128xf32>
    %cst_13 = arith.constant dense<0.000000e+00> : vector<16x128xf32>
    %31 = vector.multi_reduction <add>, %29, %cst_13 [0] : vector<1x16x128xf32> to vector<16x128xf32>
    %32 = arith.addf %30, %31 : vector<16x128xf32>
    %c0_14 = arith.constant 0 : index
    %c0_15 = arith.constant 0 : index
    %33 = vector.load %arg4[%c0_14, %c0_15] : memref<16x128xf32, #tpu.memory_space<vmem>>, vector<16x128xf32>
    tpu.vector_store %arg4[%c0_14, %c0_15], %32 {strides = array<i32>} : memref<16x128xf32, #tpu.memory_space<vmem>>, vector<16x128xf32>,
    return
  }
  func.func @transform_0(%arg0: i32, %arg1: i32) -> (i32, i32) {
    %c1_i32 = arith.constant 1 : i32
    %0 = arith.muli %arg0, %c1_i32 : i32
    %1 = arith.addi %0, %arg1 : i32
    %c0_i32 = arith.constant 0 : i32
    %c0_i32_0 = arith.constant 0 : i32
    return %1, %c0_i32 : i32, i32
  }
  func.func @transform_1(%arg0: i32, %arg1: i32) -> (i32, i32) {
    %c1_i32 = arith.constant 1 : i32
    %0 = arith.muli %arg0, %c1_i32 : i32
    %1 = arith.addi %0, %arg1 : i32
    %c0_i32 = arith.constant 0 : i32
    %c0_i32_0 = arith.constant 0 : i32
    return %1, %c0_i32 : i32, i32
  }
  func.func @transform_2(%arg0: i32, %arg1: i32) -> (i32, i32) {
    %c0_i32 = arith.constant 0 : i32
    %c0_i32_0 = arith.constant 0 : i32
    return %arg0, %c0_i32 : i32, i32
  }
}

</mosaic_0001>

<llo_original>
// kernel: tpu_custom_call.1
$region0: #{tpu_custom_call.1}
  #allocation0 [shape = 'u32[]', space=smem, size = 0x4, offset = 0x4, fixed_abs, tag = 'smem constant byte address 0x4 - core index']
  #allocation1 [shape = 'u32[144,128]{1,0:T(1,128)}', space=vmem, size = 0x12000, scoped, tag = 'internal scratch']
  %s0 = inlined_call_operand.hbm [shape: f32[16,128], index: 0, kind: input, shape index: {}]
  %s1 = inlined_call_operand.hbm [shape: f32[16,128], index: 1, kind: input, shape index: {}]
  %s2 = inlined_call_operand.hbm [shape: f32[16,128], index: 2, kind: output, shape index: {}]
  %s3 = sld [smem:[#allocation0]]
  $region30: #{tpu_custom_call.1} parent=0
    _
  %s5 = ssub.s32 1, %s3
  %s6 = scalar_select 0, %s5, %s3
  $region1: #{tpu_custom_call.1} parent=0
    #allocation2 [shape = 'u8[8192]{0}', space=vmem, size = 0x2000, scoped, tag = 'input window, operand 0, single buffered']
    #allocation3 [shape = 's32[1]{0}', space=sflag, size = 0x4, scoped, tag = 'scoped memory for tpu_custom_call.1']
    #allocation4 [shape = 's32[1]{0}', space=sflag, size = 0x4, scoped, tag = 'scoped memory for tpu_custom_call.1']
    #allocation5 [shape = 'u8[8192]{0}', space=vmem, size = 0x2000, scoped, tag = 'input window, operand 1, single buffered']
    #allocation6 [shape = 's32[1]{0}', space=sflag, size = 0x4, scoped, tag = 'scoped memory for tpu_custom_call.1']
    #allocation7 [shape = 'u8[8192]{0}', space=vmem, size = 0x2000, scoped, tag = 'output window, operand 0, single buffered']
    %7 = vsyncpa [#allocation3], 0
    %8 = vsyncpa [#allocation6], 0
    %9 = vsyncpa [#allocation4], 0
    // Predicated region
    $region2: #{tpu_custom_call.1} parent=1 // pred_check
      _
    $region3: #{tpu_custom_call.1} parent=1 // pred_check_branch
      %11 = sbr.rel (0) target = $region5
    $region4: #{tpu_custom_call.1} parent=1 // pred_region
      %s12 = sadd.s32 0, 0
      %s13 = smul.u32 2, %s12
      %s15 = ssub.s32 256, 256
      %16 = vsyncadd [#allocation3], %s15
      %s17 = smul.addr %s13, 128
      %s18 = scalar_lea.hbm %s0, %s17
      %s19 = sshll.u32 [#allocation2], 4
      %s20 = int_to_ptr.vmem [resolvable:$true] %s19
      %25 = dma.hbm_to_vmem [thread:$0]  %s18, 256, %s20, [#allocation3], 128, 128, 8
    $region5: #{tpu_custom_call.1} parent=1 // pred_fallthru
      _
    // Predicated region
    $region6: #{tpu_custom_call.1} parent=1 // pred_check
      _
    $region7: #{tpu_custom_call.1} parent=1 // pred_check_branch
      %27 = sbr.rel (0) target = $region9
    $region8: #{tpu_custom_call.1} parent=1 // pred_region
      %s28 = sadd.s32 0, 0
      %s29 = smul.u32 2, %s28
      %s31 = ssub.s32 256, 256
      %32 = vsyncadd [#allocation6], %s31
      %s33 = smul.addr %s29, 128
      %s34 = scalar_lea.hbm %s1, %s33
      %s35 = sshll.u32 [#allocation5], 4
      %s36 = int_to_ptr.vmem [resolvable:$true] %s35
      %41 = dma.hbm_to_vmem [thread:$0]  %s34, 256, %s36, [#allocation6], 128, 128, 8
    $region9: #{tpu_custom_call.1} parent=1 // pred_fallthru
      _
    // Predicated region
    $region10: #{tpu_custom_call.1} parent=1 // pred_check
      _
    $region11: #{tpu_custom_call.1} parent=1 // pred_check_branch
      %43 = sbr.rel (0) target = $region13
    $region12: #{tpu_custom_call.1} parent=1 // pred_region
      %44 = dma.done [#allocation3], 256
    $region13: #{tpu_custom_call.1} parent=1 // pred_fallthru
      _
    // Predicated region
    $region14: #{tpu_custom_call.1} parent=1 // pred_check
      _
    $region15: #{tpu_custom_call.1} parent=1 // pred_check_branch
      %46 = sbr.rel (0) target = $region17
    $region16: #{tpu_custom_call.1} parent=1 // pred_region
      %47 = dma.done [#allocation6], 256
    $region17: #{tpu_custom_call.1} parent=1 // pred_fallthru
      _
    %s48 = sadd.s32 0, 0
    %s49 = smul.u32 2, %s48
    %s50 = sadd.s32 0, 0
    %s51 = smul.u32 2, %s50
    %p52 = scmp.eq.s32.totalorder 0, 0
    // Predicated region
    $region18: #{tpu_custom_call.1} parent=1 // pred_check
      %p53 = pneg %p52
    $region19: #{tpu_custom_call.1} parent=1 // pred_check_branch
      %55 = sbr.rel (%p53) target = $region21
    $region20: #{tpu_custom_call.1} parent=1 // pred_region
      %56 = vst [vmem:[#allocation7] sm:$0xff] 0.0
      %57 = vst [vmem:[#allocation7 + $0x8] sm:$0xff] 0.0
    $region21: #{tpu_custom_call.1} parent=1 // pred_fallthru
      _
    %v58 = vld [vmem:[#allocation2] sm:$0xff]
    %v59 = vld [vmem:[#allocation2 + $0x8] sm:$0xff]
    %v60 = vld [vmem:[#allocation5] sm:$0xff]
    %v61 = vld [vmem:[#allocation5 + $0x8] sm:$0xff]
    %v62 = vand.u32 2147483647, %v58
    %v63 = vand.u32 2147483647, %v59
    %v64 = vsub.f32 0.0, %v62
    %v65 = vsub.f32 0.0, %v63
    %v66 = vmul.f32 %v64, 1.442695
    %v67 = vpow.pop %v66
    %v68 = vmul.f32 %v65, 1.442695
    %v69 = vpow.pop %v68
    %v70 = vadd.f32 %v67, 1.0
    %v71 = vadd.f32 %v69, 1.0
    %v72 = vlog2.pop %v70
    %v73 = vmul.f32 %v72, 0.6931472
    %v74 = vlog2.pop %v71
    %v75 = vmul.f32 %v74, 0.6931472
    %v76 = vmax.f32 %v58, 0.0
    %v77 = vmax.f32 %v59, 0.0
    %v78 = vadd.f32 %v73, %v76
    %v79 = vadd.f32 %v75, %v77
    %v80 = vsub.f32 %v58, %v78
    %v81 = vsub.f32 %v59, %v79
    %v82 = vmax.f32 %v80, -100.0
    %v83 = vmax.f32 %v81, -100.0
    %v84 = vsub.f32 0.0, %v78
    %v85 = vsub.f32 0.0, %v79
    %v86 = vmax.f32 %v84, -100.0
    %v87 = vmax.f32 %v85, -100.0
    %v88 = vmul.f32 %v60, %v82
    %v89 = vmul.f32 %v61, %v83
    %v90 = vsub.f32 1.0, %v60
    %v91 = vsub.f32 1.0, %v61
    %v92 = vmul.f32 %v90, %v86
    %v93 = vmul.f32 %v91, %v87
    %v94 = vadd.f32 %v88, %v92
    %v95 = vadd.f32 %v89, %v93
    %v96 = vsub.f32 0.0, %v94
    %v97 = vsub.f32 0.0, %v95
    %v98 = vld [vmem:[#allocation7] sm:$0xff]
    %v99 = vld [vmem:[#allocation7 + $0x8] sm:$0xff]
    %v100 = vadd.f32 %v96, 0.0
    %v101 = vadd.f32 %v97, 0.0
    %v102 = vadd.f32 %v98, %v100
    %v103 = vadd.f32 %v99, %v101
    %104 = vst [vmem:[#allocation7] sm:$0xff] %v102
    %105 = vst [vmem:[#allocation7 + $0x8] sm:$0xff] %v103
    // Predicated region
    $region22: #{tpu_custom_call.1} parent=1 // pred_check
      _
    $region23: #{tpu_custom_call.1} parent=1 // pred_check_branch
      %107 = sbr.rel (0) target = $region25
    $region24: #{tpu_custom_call.1} parent=1 // pred_region
      %s109 = ssub.s32 256, 256
      %110 = vsyncadd [#allocation4], %s109
      %s111 = sshll.u32 [#allocation7], 4
      %s112 = int_to_ptr.vmem [resolvable:$true] %s111
      %117 = dma.vmem_to_hbm [thread:$0]  %s112, 256, %s2, [#allocation4], 128, 128, 8
    $region25: #{tpu_custom_call.1} parent=1 // pred_fallthru
      _
    // Predicated region
    $region26: #{tpu_custom_call.1} parent=1 // pred_check
      _
    $region27: #{tpu_custom_call.1} parent=1 // pred_check_branch
      %119 = sbr.rel (0) target = $region29
    $region28: #{tpu_custom_call.1} parent=1 // pred_region
      %120 = dma.done [#allocation4], 256
    $region29: #{tpu_custom_call.1} parent=1 // pred_fallthru
      _
    %121 = vsyncpa [#allocation3], 1
    %122 = vsyncpa [#allocation6], 1
    %123 = vsyncpa [#allocation4], 1

</llo_original>
